<compile_context>
chip_gen: v7x
topology: tpu7x:2x2x1
jax: 0.10.0
libtpu: 0.0.40
codegen_flags: <defaults>
</compile_context>

<pallas_src>
import functools

import jax
import jax.numpy as jnp
from jax.experimental import pallas as pl
from jax.experimental.pallas import tpu as pltpu

# ----- "config" constants (small synthetic sizes) ---------------------------
BATCH = 2
SEQ = 8                      # text sequence length
HIDDEN = 32                  # bert_config.hidden_size
NUM_CLASSES = 3              # VE: entailment / neutral / contradiction
LAST_HIDDEN_ID_SHIFT = 2     # config['last_hidden_id_shift']
VOCAB = 64
IMG_C, IMG_H, IMG_W = 4, 16, 16
LANES = 128                  # lane-dense padding for the output / second matmul


# ----------------------------- Pallas kernel --------------------------------
def ve_head_kernel(ids_ref, tgt_ref,            # scalar-prefetch (SMEM)
                   hrow_ref,                    # (1, 1, H) gathered hidden row
                   w1_ref, b1_ref,              # (H, H), (1, H)
                   w2_ref, b2_ref,              # (H, LANES), (1, LANES)  zero-padded
                   out_ref,                     # (1, 1, LANES)
                   *, num_classes):
    b = pl.program_id(0)

    # gathered decoder state for this batch element (DMA'd by the index_map)
    x = hrow_ref[0]                                              # (1, H)

    # cls_head: Linear -> ReLU -> Linear(3)  (second Linear is lane-padded)
    h1 = jnp.dot(x, w1_ref[...],
                 preferred_element_type=jnp.float32) + b1_ref[...]
    h1 = jnp.maximum(h1, 0.0)
    logits = jnp.dot(h1, w2_ref[...],
                     preferred_element_type=jnp.float32) + b2_ref[...]   # (1, LANES)

    # cross-entropy (per-example NLL); padded lanes masked out of the LSE
    lane = jax.lax.broadcasted_iota(jnp.int32, logits.shape, 1)   # (1, LANES)
    valid = lane < num_classes
    masked = jnp.where(valid, logits, jnp.float32(-1e30))
    m = jnp.max(masked, axis=1, keepdims=True)
    lse = m + jnp.log(jnp.sum(jnp.exp(masked - m), axis=1, keepdims=True))
    tgt = tgt_ref[b]                                              # SMEM scalar
    tgt_logit = jnp.sum(jnp.where(lane == tgt, logits, 0.0),
                        axis=1, keepdims=True)
    nll = lse - tgt_logit                                         # (1, 1)

    # lane-dense output row: lanes [0:C) = logits, lane C = per-example NLL
    row = jnp.where(valid, logits, 0.0)
    row = jnp.where(lane == num_classes, nll, row)
    out_ref[0] = row


def ve_head_pallas(attention_mask, hidden, targets, params):
    B, L = attention_mask.shape
    H = hidden.shape[-1]
    C = NUM_CLASSES

    # last_state_ids = attention_mask.sum(1) - last_hidden_id_shift
    # (clamped to [0, L): torch indexing would raise on out-of-range ids;
    #  here we clamp so the gather stays well-defined on hardware)
    last_ids = jnp.sum(attention_mask.astype(jnp.int32), axis=1) - LAST_HIDDEN_ID_SHIFT
    last_ids = jnp.clip(last_ids, 0, L - 1)
    flat_ids = (jnp.arange(B, dtype=jnp.int32) * L + last_ids).astype(jnp.int32)

    # (B, L, H) -> (B*L, 1, H): gathered dim leads, last two dims are full-size
    hidden_rows = hidden.astype(jnp.float32).reshape(B * L, 1, H)

    # zero-pad the 3-class projection to 128 lanes (lane-dense matmul + store)
    w2p = jnp.zeros((H, LANES), jnp.float32).at[:, :C].set(
        params["w2"].astype(jnp.float32))
    b2p = jnp.zeros((1, LANES), jnp.float32).at[:, :C].set(
        params["b2"].reshape(1, C).astype(jnp.float32))

    kernel = functools.partial(ve_head_kernel, num_classes=C)

    out = pl.pallas_call(
        kernel,
        out_shape=jax.ShapeDtypeStruct((B, 1, LANES), jnp.float32),
        grid_spec=pltpu.PrefetchScalarGridSpec(
            num_scalar_prefetch=2,               # flat_ids, targets -> SMEM
            grid=(B,),
            in_specs=[
                # data-dependent row gather: DMA only hidden[b, last_id[b], :]
                pl.BlockSpec((1, 1, H), lambda b, ids, tgt: (ids[b], 0, 0)),
                pl.BlockSpec((H, H),    lambda b, ids, tgt: (0, 0)),
                pl.BlockSpec((1, H),    lambda b, ids, tgt: (0, 0)),
                pl.BlockSpec((H, LANES), lambda b, ids, tgt: (0, 0)),
                pl.BlockSpec((1, LANES), lambda b, ids, tgt: (0, 0)),
            ],
            out_specs=pl.BlockSpec((1, 1, LANES), lambda b, ids, tgt: (b, 0, 0)),
        ),
        compiler_params=pltpu.CompilerParams(
            dimension_semantics=("parallel",)),   # batch axis -> both TCs on v7x
    )(
        flat_ids,
        targets.astype(jnp.int32),
        hidden_rows,
        params["w1"].astype(jnp.float32),
        params["b1"].reshape(1, H).astype(jnp.float32),
        w2p,
        b2p,
    )

    out = out.reshape(B, LANES)
    pred = out[:, :C]                 # (B, 3) logits
    loss = jnp.mean(out[:, C])        # mean of per-example NLL == F.cross_entropy
    return pred, loss


# ------------------------- DaVinci backbone stub -----------------------------
def davinci_backbone_stub(params, image, input_ids):
    # TODO(synk): the full DaVinci backbone (ResNet-50 visual encoder + BERT
    # text decoder + dummy-prompt conditioning) has no clean standalone Pallas
    # equivalent here; this deterministic stub produces decoder hidden states.
    tok_emb = params["tok_emb"][input_ids]                 # (B, L, H)
    img_feat = image.mean(axis=(2, 3))                     # (B, C) GAP (NCHW)
    img_h = img_feat @ params["img_proj"]                  # (B, H)
    return tok_emb + img_h[:, None, :]                     # (B, L, H)


# ---------------------------- full forward -----------------------------------
def davinci_ve_forward(params, image, attention_mask, input_ids, targets,
                       train=True):
    hidden = davinci_backbone_stub(params, image, input_ids)
    prediction, loss = ve_head_pallas(attention_mask, hidden, targets, params)
    return loss if train else prediction


def init_params(key):
    ks = jax.random.split(key, 6)
    H, C = HIDDEN, NUM_CLASSES
    return {
        "tok_emb": 0.02 * jax.random.normal(ks[0], (VOCAB, H), jnp.float32),
        "img_proj": 0.02 * jax.random.normal(ks[1], (IMG_C, H), jnp.float32),
        "w1": (1.0 / jnp.sqrt(H)) * jax.random.normal(ks[2], (H, H), jnp.float32),
        "b1": jnp.zeros((H,), jnp.float32),
        "w2": (1.0 / jnp.sqrt(H)) * jax.random.normal(ks[3], (H, C), jnp.float32),
        "b2": jnp.zeros((C,), jnp.float32),
    }


if __name__ == "__main__":
    key = jax.random.PRNGKey(0)
    kp, ki, kt = jax.random.split(key, 3)
    params = init_params(kp)

    image = jax.random.normal(ki, (BATCH, IMG_C, IMG_H, IMG_W), jnp.float32)
    input_ids = jax.random.randint(kt, (BATCH, SEQ), 0, VOCAB, jnp.int32)
    # variable-length text: lengths 8 and 5 -> valid last_state_ids after shift
    lengths = jnp.array([8, 5], jnp.int32)
    attention_mask = (jnp.arange(SEQ)[None, :] < lengths[:, None]).astype(jnp.int32)
    targets = jnp.array([0, 2], jnp.int32)

    loss = davinci_ve_forward(params, image, attention_mask, input_ids,
                              targets, train=True)
    pred = davinci_ve_forward(params, image, attention_mask, input_ids,
                              targets, train=False)
    jax.block_until_ready((loss, pred))
    assert pred.shape == (BATCH, NUM_CLASSES)
    assert loss.shape == ()
    print("KERNEL_OK")
</pallas_src>

<mosaic_0001>
module attributes {stable_mosaic.version = 11 : i64} {
  func.func @ve_head_kernel(%arg0: i32, %arg1: memref<2xi32, #tpu.memory_space<smem>>, %arg2: memref<2xi32, #tpu.memory_space<smem>>, %arg3: memref<1x1x32xf32, #tpu.memory_space<vmem>>, %arg4: memref<32x32xf32, #tpu.memory_space<vmem>>, %arg5: memref<1x32xf32, #tpu.memory_space<vmem>>, %arg6: memref<32x128xf32, #tpu.memory_space<vmem>>, %arg7: memref<1x128xf32, #tpu.memory_space<vmem>>, %arg8: memref<1x1x128xf32, #tpu.memory_space<vmem>>) attributes {dimension_semantics = [#tpu.dimension_semantics<parallel>], iteration_bounds = array<i64: 2>, scalar_prefetch = 2 : i64, scratch_operands = 0 : i64, tpu.core_type = #tpu.core_type<tc>, window_params = [{transform_indices = @transform_0, window_bounds = array<i64: 1, 1, 32>}, {pipeline_mode = #tpu.pipeline_mode<synchronous>, transform_indices = @transform_1, window_bounds = array<i64: 32, 32>}, {pipeline_mode = #tpu.pipeline_mode<synchronous>, transform_indices = @transform_2, window_bounds = array<i64: 1, 32>}, {pipeline_mode = #tpu.pipeline_mode<synchronous>, transform_indices = @transform_3, window_bounds = array<i64: 32, 128>}, {pipeline_mode = #tpu.pipeline_mode<synchronous>, transform_indices = @transform_4, window_bounds = array<i64: 1, 128>}, {transform_indices = @transform_5, window_bounds = array<i64: 1, 1, 128>}]} {
    %c0 = arith.constant 0 : index
    %c0_0 = arith.constant 0 : index
    %c0_1 = arith.constant 0 : index
    %0 = vector.load %arg3[%c0, %c0_0, %c0_1] : memref<1x1x32xf32, #tpu.memory_space<vmem>>, vector<1x1x32xf32>
    %1 = vector.shape_cast %0 : vector<1x1x32xf32> to vector<1x32xf32>
    %c0_2 = arith.constant 0 : index
    %c0_3 = arith.constant 0 : index
    %2 = vector.load %arg4[%c0_2, %c0_3] : memref<32x32xf32, #tpu.memory_space<vmem>>, vector<32x32xf32>
    %cst = arith.constant dense<0.000000e+00> : vector<1x32xf32>
    %3 = tpu.matmul %1, %2, %cst {dimension_numbers = #tpu.dot_dimension_numbers<[1], [0], [0], [1], [0, 0, 1, 1], [], []>} : vector<1x32xf32>, vector<32x32xf32>, vector<1x32xf32> -> vector<1x32xf32>
    %c0_4 = arith.constant 0 : index
    %c0_5 = arith.constant 0 : index
    %4 = vector.load %arg5[%c0_4, %c0_5] : memref<1x32xf32, #tpu.memory_space<vmem>>, vector<1x32xf32>
    %5 = arith.addf %3, %4 : vector<1x32xf32>
    %cst_6 = arith.constant 0.000000e+00 : f32
    %6 = vector.broadcast %cst_6 : f32 to vector<1x32xf32>
    %7 = arith.maximumf %5, %6 : vector<1x32xf32>
    %c0_7 = arith.constant 0 : index
    %c0_8 = arith.constant 0 : index
    %8 = vector.load %arg6[%c0_7, %c0_8] : memref<32x128xf32, #tpu.memory_space<vmem>>, vector<32x128xf32>
    %cst_9 = arith.constant dense<0.000000e+00> : vector<1x128xf32>
    %9 = tpu.matmul %7, %8, %cst_9 {dimension_numbers = #tpu.dot_dimension_numbers<[1], [0], [0], [1], [0, 0, 1, 1], [], []>} : vector<1x32xf32>, vector<32x128xf32>, vector<1x128xf32> -> vector<1x128xf32>
    %c0_10 = arith.constant 0 : index
    %c0_11 = arith.constant 0 : index
    %10 = vector.load %arg7[%c0_10, %c0_11] : memref<1x128xf32, #tpu.memory_space<vmem>>, vector<1x128xf32>
    %11 = arith.addf %9, %10 : vector<1x128xf32>
    %12 = tpu.iota {dimensions = array<i32: 1>} : vector<1x128xi32>
    %c3_i32 = arith.constant 3 : i32
    %13 = vector.broadcast %c3_i32 : i32 to vector<1x128xi32>
    %14 = arith.cmpi slt, %12, %13 : vector<1x128xi32>
    %cst_12 = arith.constant -1.000000e+30 : f32
    %15 = vector.broadcast %cst_12 : f32 to vector<1x128xf32>
    %16 = arith.select %14, %11, %15 : vector<1x128xi1>, vector<1x128xf32>
    %cst_13 = arith.constant dense<0xFF800000> : vector<1xf32>
    %17 = vector.multi_reduction <maximumf>, %16, %cst_13 [1] : vector<1x128xf32> to vector<1xf32>
    %18 = vector.shape_cast %17 : vector<1xf32> to vector<1x1xf32>
    %19 = vector.broadcast %18 : vector<1x1xf32> to vector<1x128xf32>
    %20 = arith.subf %16, %19 : vector<1x128xf32>
    %21 = math.exp %20 : vector<1x128xf32>
    %cst_14 = arith.constant dense<0.000000e+00> : vector<1xf32>
    %22 = vector.multi_reduction <add>, %21, %cst_14 [1] : vector<1x128xf32> to vector<1xf32>
    %23 = vector.shape_cast %22 : vector<1xf32> to vector<1x1xf32>
    %24 = math.log %23 : vector<1x1xf32>
    %25 = arith.addf %18, %24 : vector<1x1xf32>
    %26 = arith.index_cast %arg0 : i32 to index
    %27 = memref.load %arg2[%26] : memref<2xi32, #tpu.memory_space<smem>>
    %28 = vector.broadcast %27 : i32 to vector<1x128xi32>
    %29 = arith.cmpi eq, %12, %28 : vector<1x128xi32>
    %cst_15 = arith.constant 0.000000e+00 : f32
    %30 = vector.broadcast %cst_15 : f32 to vector<1x128xf32>
    %31 = arith.select %29, %11, %30 : vector<1x128xi1>, vector<1x128xf32>
    %cst_16 = arith.constant dense<0.000000e+00> : vector<1xf32>
    %32 = vector.multi_reduction <add>, %31, %cst_16 [1] : vector<1x128xf32> to vector<1xf32>
    %33 = vector.shape_cast %32 : vector<1xf32> to vector<1x1xf32>
    %34 = arith.subf %25, %33 : vector<1x1xf32>
    %cst_17 = arith.constant 0.000000e+00 : f32
    %35 = vector.broadcast %cst_17 : f32 to vector<1x128xf32>
    %36 = arith.select %14, %11, %35 : vector<1x128xi1>, vector<1x128xf32>
    %c3_i32_18 = arith.constant 3 : i32
    %37 = vector.broadcast %c3_i32_18 : i32 to vector<1x128xi32>
    %38 = arith.cmpi eq, %12, %37 : vector<1x128xi32>
    %39 = vector.shape_cast %34 : vector<1x1xf32> to vector<1x1xf32>
    %40 = vector.broadcast %39 : vector<1x1xf32> to vector<1x128xf32>
    %41 = arith.select %38, %40, %36 : vector<1x128xi1>, vector<1x128xf32>
    %c0_19 = arith.constant 0 : index
    %c0_20 = arith.constant 0 : index
    %c0_21 = arith.constant 0 : index
    %42 = vector.load %arg8[%c0_19, %c0_20, %c0_21] : memref<1x1x128xf32, #tpu.memory_space<vmem>>, vector<1x1x128xf32>
    %43 = vector.shape_cast %42 : vector<1x1x128xf32> to vector<1x128xf32>
    %44 = vector.shape_cast %41 : vector<1x128xf32> to vector<1x1x128xf32>
    tpu.vector_store %arg8[%c0_19, %c0_20, %c0_21], %44 {strides = array<i32>} : memref<1x1x128xf32, #tpu.memory_space<vmem>>, vector<1x1x128xf32>,
    return
  }
  func.func @transform_0(%arg0: i32, %arg1: memref<2xi32, #tpu.memory_space<smem>>, %arg2: memref<2xi32, #tpu.memory_space<smem>>) -> (i32, i32, i32) {
    %0 = arith.index_cast %arg0 : i32 to index
    %1 = memref.load %arg1[%0] : memref<2xi32, #tpu.memory_space<smem>>
    %c0_i32 = arith.constant 0 : i32
    %c0_i32_0 = arith.constant 0 : i32
    %c0_i32_1 = arith.constant 0 : i32
    return %1, %c0_i32, %c0_i32_0 : i32, i32, i32
  }
  func.func @transform_1(%arg0: i32, %arg1: memref<2xi32, #tpu.memory_space<smem>>, %arg2: memref<2xi32, #tpu.memory_space<smem>>) -> (i32, i32) {
    %c0_i32 = arith.constant 0 : i32
    %c0_i32_0 = arith.constant 0 : i32
    %c0_i32_1 = arith.constant 0 : i32
    return %c0_i32, %c0_i32_0 : i32, i32
  }
  func.func @transform_2(%arg0: i32, %arg1: memref<2xi32, #tpu.memory_space<smem>>, %arg2: memref<2xi32, #tpu.memory_space<smem>>) -> (i32, i32) {
    %c0_i32 = arith.constant 0 : i32
    %c0_i32_0 = arith.constant 0 : i32
    %c0_i32_1 = arith.constant 0 : i32
    return %c0_i32, %c0_i32_0 : i32, i32
  }
  func.func @transform_3(%arg0: i32, %arg1: memref<2xi32, #tpu.memory_space<smem>>, %arg2: memref<2xi32, #tpu.memory_space<smem>>) -> (i32, i32) {
    %c0_i32 = arith.constant 0 : i32
    %c0_i32_0 = arith.constant 0 : i32
    %c0_i32_1 = arith.constant 0 : i32
    return %c0_i32, %c0_i32_0 : i32, i32
  }
  func.func @transform_4(%arg0: i32, %arg1: memref<2xi32, #tpu.memory_space<smem>>, %arg2: memref<2xi32, #tpu.memory_space<smem>>) -> (i32, i32) {
    %c0_i32 = arith.constant 0 : i32
    %c0_i32_0 = arith.constant 0 : i32
    %c0_i32_1 = arith.constant 0 : i32
    return %c0_i32, %c0_i32_0 : i32, i32
  }
  func.func @transform_5(%arg0: i32, %arg1: memref<2xi32, #tpu.memory_space<smem>>, %arg2: memref<2xi32, #tpu.memory_space<smem>>) -> (i32, i32, i32) {
    %c0_i32 = arith.constant 0 : i32
    %c0_i32_0 = arith.constant 0 : i32
    %c0_i32_1 = arith.constant 0 : i32
    return %arg0, %c0_i32, %c0_i32_0 : i32, i32, i32
  }
}

</mosaic_0001>

<llo_original>
// kernel: tpu_custom_call.1
$region0: #{tpu_custom_call.1}
  #allocation0 [shape = 'u32[]', space=smem, size = 0x4, offset = 0x4, fixed_abs, tag = 'smem constant byte address 0x4 - core index']
  #allocation1 [shape = 'u32[144,128]{1,0:T(1,128)}', space=vmem, size = 0x12000, scoped, tag = 'internal scratch']
  #allocation2 [shape = 's32[1]{0}', space=sflag, size = 0x4, scoped, tag = 'scoped memory for tpu_custom_call.1']
  #allocation3 [shape = 'u8[512]{0}', space=smem, size = 0x200, scoped, tag = 'prefetched SMEM operand 0']
  #allocation4 [shape = 'u8[512]{0}', space=smem, size = 0x200, scoped, tag = 'prefetched SMEM operand 1']
  %s0 = inlined_call_operand.hbm [shape: s32[2], index: 0, kind: input, shape index: {}]
  %s1 = inlined_call_operand.vmem [shape: s32[2], index: 1, kind: input, shape index: {}]
  %s2 = inlined_call_operand.hbm [shape: f32[16,1,32], index: 2, kind: input, shape index: {}]
  %s3 = inlined_call_operand.hbm [shape: f32[32,32], index: 3, kind: input, shape index: {}]
  %s4 = inlined_call_operand.vmem [shape: f32[1,32], index: 4, kind: input, shape index: {}]
  %s5 = inlined_call_operand.hbm [shape: f32[32,128], index: 5, kind: input, shape index: {}]
  %s6 = inlined_call_operand.vmem [shape: f32[1,128], index: 6, kind: input, shape index: {}]
  %s7 = inlined_call_operand.hbm [shape: f32[2,1,128], index: 7, kind: output, shape index: {}]
  %s8 = sld [smem:[#allocation0]]
  $region65: #{tpu_custom_call.1} parent=0
    _
  %s10 = ssub.s32 1, %s8
  %s11 = scalar_select 0, %s10, %s8
  %13 = dma.hbm_to_smem %s0, 16, [#allocation3], [#allocation2]
  %s14 = sshll.u32 %s1, 4
  %s15 = int_to_ptr.vmem [resolvable:$true] %s14
  %17 = dma.vmem_to_smem %s15, 16, [#allocation4], [#allocation2]
  %18 = dma.done [#allocation2], 32
  %19 = sfence
  $region1: #{tpu_custom_call.1} parent=0
    #allocation5 [shape = 'u8[1024]{0}', space=vmem, size = 0x400, scoped, tag = 'input window, operand 2']
    #allocation6 [shape = 's32[2]{0}', space=sflag, size = 0x8, scoped, tag = 'scoped memory for tpu_custom_call.1']
    #allocation7 [shape = 's32[2]{0}', space=sflag, size = 0x8, scoped, tag = 'scoped memory for tpu_custom_call.1']
    #allocation8 [shape = 'u8[16384]{0}', space=vmem, size = 0x4000, scoped, tag = 'input window, operand 3, single buffered']
    #allocation9 [shape = 's32[1]{0}', space=sflag, size = 0x4, scoped, tag = 'scoped memory for tpu_custom_call.1']
    #allocation10 [shape = 'u8[16384]{0}', space=vmem, size = 0x4000, scoped, tag = 'input window, operand 5, single buffered']
    #allocation11 [shape = 'u8[1024]{0}', space=vmem, size = 0x400, scoped, tag = 'output window, operand 0']
    %20 = vsyncpa [#allocation6], 0
    %s21 = scalar_lea.sflag [#allocation6], 1
    %22 = vsyncpa %s21, 0
    %23 = vsyncpa [#allocation9], 0
    %24 = vsyncpa [#allocation7], 0
    %s25 = scalar_lea.sflag [#allocation7], 1
    %26 = vsyncpa %s25, 0
    loop: start=0, step=1, limit=4
    $region2: #{tpu_custom_call.1} parent=1 // loop_pre_header
      _
    $region3: #{tpu_custom_call.1} parent=1 // loop_header
      %s28 = sphi 0, %s32
      %p29 = scmp.ge.s32.totalorder %s28, 4
      %s40 = sphi 0, %s42
      %s43 = sphi 0, %s40
      %s44 = sphi 0, %s43
      %s60 = sphi 0, %s44
      %s64 = sphi 0, %s64
      %s66 = sphi 0, %s64
      %s67 = sphi 0, %s66
      %s81 = sphi 0, %s67
      %s85 = sphi 0, %s85
      %s87 = sphi 0, %s85
      %s88 = sphi 0, %s87
      %s102 = sphi 0, %s88
      %s106 = sphi 0, %s106
      %s108 = sphi 0, %s106
      %s109 = sphi 0, %s108
      %s123 = sphi 0, %s109
      %s127 = sphi 0, %s127
      %s129 = sphi 0, %s127
      %s130 = sphi 0, %s129
      %s144 = sphi 0, %s130
      %s150 = sphi 0, %s152
      %s153 = sphi 0, %s150
      %s154 = sphi 0, %s153
      %s170 = sphi 0, %s154
    $region4: #{tpu_custom_call.1} parent=1 // loop_header_branch
      %31 = sbr.rel (%p29) target = $region8
    $region5: #{tpu_custom_call.1} parent=1 // loop_body
      %s33 = ssub.s32 %s28, 1
      %s34 = ssub.s32 %s28, 2
      %s35 = sadd.s32 %s28, 1
      %s36 = sld [smem:[#allocation3 + %s28]]
      %s37 = sld [smem:[#allocation3 + %s35]]
      %s38 = ssub.s32 %s36, %s37
      %p39 = scmp.eq.s32.totalorder %s38, 0
      %s41 = sadd.s32 %s40, 1
      %s42 = scalar_select %p39, %s40, %s41
      %p45 = pneg %p39
      %p46 = scmp.eq.s32.totalorder %s28, 1
      %p47 = por %p45, %p46
      %p48 = scmp.ne.s32.totalorder %s40, %s43
      %p49 = scmp.eq.s32.totalorder %s28, 0
      %p50 = por %p48, %p49
      %p51 = scmp.ne.s32.totalorder %s40, %s43
      %p52 = scmp.eq.s32.totalorder %s33, 1
      %p53 = por %p51, %p52
      %p54 = scmp.ne.s32.totalorder %s43, %s44
      %p55 = scmp.eq.s32.totalorder %s33, 0
      %p56 = por %p54, %p55
      %p57 = scmp.ne.s32.totalorder %s43, %s44
      %p58 = scmp.eq.s32.totalorder %s34, 1
      %p59 = por %p57, %p58
      %p61 = scmp.ne.s32.totalorder %s44, %s60
      %p62 = scmp.eq.s32.totalorder %s34, 0
      %p63 = por %p61, %p62
      %s65 = sadd.s32 %s64, 1
      %p68 = scmp.eq.s32.totalorder %s28, 1
      %p69 = scmp.ne.s32.totalorder %s64, %s66
      %p70 = scmp.eq.s32.totalorder %s28, 0
      %p71 = por %p69, %p70
      %p72 = scmp.ne.s32.totalorder %s64, %s66
      %p73 = scmp.eq.s32.totalorder %s33, 1
      %p74 = por %p72, %p73
      %p75 = scmp.ne.s32.totalorder %s66, %s67
      %p76 = scmp.eq.s32.totalorder %s33, 0
      %p77 = por %p75, %p76
      %p78 = scmp.ne.s32.totalorder %s66, %s67
      %p79 = scmp.eq.s32.totalorder %s34, 1
      %p80 = por %p78, %p79
      %p82 = scmp.ne.s32.totalorder %s67, %s81
      %p83 = scmp.eq.s32.totalorder %s34, 0
      %p84 = por %p82, %p83
      %s86 = sadd.s32 %s85, 1
      %p89 = scmp.eq.s32.totalorder %s28, 1
      %p90 = scmp.ne.s32.totalorder %s85, %s87
      %p91 = scmp.eq.s32.totalorder %s28, 0
      %p92 = por %p90, %p91
      %p93 = scmp.ne.s32.totalorder %s85, %s87
      %p94 = scmp.eq.s32.totalorder %s33, 1
      %p95 = por %p93, %p94
      %p96 = scmp.ne.s32.totalorder %s87, %s88
      %p97 = scmp.eq.s32.totalorder %s33, 0
      %p98 = por %p96, %p97
      %p99 = scmp.ne.s32.totalorder %s87, %s88
      %p100 = scmp.eq.s32.totalorder %s34, 1
      %p101 = por %p99, %p100
      %p103 = scmp.ne.s32.totalorder %s88, %s102
      %p104 = scmp.eq.s32.totalorder %s34, 0
      %p105 = por %p103, %p104
      %s107 = sadd.s32 %s106, 1
      %p110 = scmp.eq.s32.totalorder %s28, 1
      %p111 = scmp.ne.s32.totalorder %s106, %s108
      %p112 = scmp.eq.s32.totalorder %s28, 0
      %p113 = por %p111, %p112
      %p114 = scmp.ne.s32.totalorder %s106, %s108
      %p115 = scmp.eq.s32.totalorder %s33, 1
      %p116 = por %p114, %p115
      %p117 = scmp.ne.s32.totalorder %s108, %s109
      %p118 = scmp.eq.s32.totalorder %s33, 0
      %p119 = por %p117, %p118
      %p120 = scmp.ne.s32.totalorder %s108, %s109
      %p121 = scmp.eq.s32.totalorder %s34, 1
      %p122 = por %p120, %p121
      %p124 = scmp.ne.s32.totalorder %s109, %s123
      %p125 = scmp.eq.s32.totalorder %s34, 0
      %p126 = por %p124, %p125
      %s128 = sadd.s32 %s127, 1
      %p131 = scmp.eq.s32.totalorder %s28, 1
      %p132 = scmp.ne.s32.totalorder %s127, %s129
      %p133 = scmp.eq.s32.totalorder %s28, 0
      %p134 = por %p132, %p133
      %p135 = scmp.ne.s32.totalorder %s127, %s129
      %p136 = scmp.eq.s32.totalorder %s33, 1
      %p137 = por %p135, %p136
      %p138 = scmp.ne.s32.totalorder %s129, %s130
      %p139 = scmp.eq.s32.totalorder %s33, 0
      %p140 = por %p138, %p139
      %p141 = scmp.ne.s32.totalorder %s129, %s130
      %p142 = scmp.eq.s32.totalorder %s34, 1
      %p143 = por %p141, %p142
      %p145 = scmp.ne.s32.totalorder %s130, %s144
      %p146 = scmp.eq.s32.totalorder %s34, 0
      %p147 = por %p145, %p146
      %s148 = ssub.s32 %s28, %s35
      %p149 = scmp.eq.s32.totalorder %s148, 0
      %s151 = sadd.s32 %s150, 1
      %s152 = scalar_select %p149, %s150, %s151
      %p155 = pneg %p149
      %p156 = scmp.eq.s32.totalorder %s28, 1
      %p157 = por %p155, %p156
      %p158 = scmp.ne.s32.totalorder %s150, %s153
      %p159 = scmp.eq.s32.totalorder %s28, 0
      %p160 = por %p158, %p159
      %p161 = scmp.ne.s32.totalorder %s150, %s153
      %p162 = scmp.eq.s32.totalorder %s33, 1
      %p163 = por %p161, %p162
      %p164 = scmp.ne.s32.totalorder %s153, %s154
      %p165 = scmp.eq.s32.totalorder %s33, 0
      %p166 = por %p164, %p165
      %p167 = scmp.ne.s32.totalorder %s153, %s154
      %p168 = scmp.eq.s32.totalorder %s34, 1
      %p169 = por %p167, %p168
      %p171 = scmp.ne.s32.totalorder %s154, %s170
      %p172 = scmp.eq.s32.totalorder %s34, 0
      %p173 = por %p171, %p172
      %p174 = scmp.le.s32.totalorder 1, %s28
      %p175 = scmp.lt.s32.totalorder %s28, 3
      %p176 = pnand %p174, %p175
      %p177 = pneg %p176
      // Predicated region
      $region9: #{tpu_custom_call.1} parent=5 // pred_check
        _
      $region10: #{tpu_custom_call.1} parent=5 // pred_check_branch
        %179 = sbr.rel (%p176) target = $region12
      $region11: #{tpu_custom_call.1} parent=5 // pred_region
        %s180 = ssub.s32 %s28, 1
        // Predicated region
        $region13: #{tpu_custom_call.1} parent=11 // pred_check
          %p181 = pneg %p77
        $region14: #{tpu_custom_call.1} parent=11 // pred_check_branch
          %183 = sbr.rel (%p181) target = $region16
        $region15: #{tpu_custom_call.1} parent=11 // pred_region
          %s185 = ssub.s32 512, 512
          %186 = vsyncadd [#allocation9], %s185
          %s187 = sshll.u32 [#allocation8], 4
          %s188 = int_to_ptr.vmem [resolvable:$true] %s187
          %193 = dma.hbm_to_vmem [thread:$0]  %s3, 512, %s188, [#allocation9], 128, 128, 8
        $region16: #{tpu_custom_call.1} parent=11 // pred_fallthru
          _
        // Predicated region
        $region17: #{tpu_custom_call.1} parent=11 // pred_check
          %p194 = pneg %p98
        $region18: #{tpu_custom_call.1} parent=11 // pred_check_branch
          %196 = sbr.rel (%p194) target = $region20
        $region19: #{tpu_custom_call.1} parent=11 // pred_region
          _
        $region20: #{tpu_custom_call.1} parent=11 // pred_fallthru
          _
        // Predicated region
        $region21: #{tpu_custom_call.1} parent=11 // pred_check
          %p197 = pneg %p119
        $region22: #{tpu_custom_call.1} parent=11 // pred_check_branch
          %199 = sbr.rel (%p197) target = $region24
        $region23: #{tpu_custom_call.1} parent=11 // pred_region
          %s201 = ssub.s32 512, 512
          %202 = vsyncadd [#allocation9], %s201
          %s203 = sshll.u32 [#allocation10], 4
          %s204 = int_to_ptr.vmem [resolvable:$true] %s203
          %209 = dma.hbm_to_vmem [thread:$0]  %s5, 512, %s204, [#allocation9], 128, 128, 8
        $region24: #{tpu_custom_call.1} parent=11 // pred_fallthru
          _
        // Predicated region
        $region25: #{tpu_custom_call.1} parent=11 // pred_check
          %p210 = pneg %p140
        $region26: #{tpu_custom_call.1} parent=11 // pred_check_branch
          %212 = sbr.rel (%p210) target = $region28
        $region27: #{tpu_custom_call.1} parent=11 // pred_region
          _
        $region28: #{tpu_custom_call.1} parent=11 // pred_fallthru
          _
      $region12: #{tpu_custom_call.1} parent=5 // pred_fallthru
        _
      %p213 = scmp.lt.s32.totalorder %s28, 2
      // Predicated region
      $region29: #{tpu_custom_call.1} parent=5 // pred_check
        %p214 = pneg %p213
      $region30: #{tpu_custom_call.1} parent=5 // pred_check_branch
        %216 = sbr.rel (%p214) target = $region32
      $region31: #{tpu_custom_call.1} parent=5 // pred_region
        // Predicated region
        $region33: #{tpu_custom_call.1} parent=31 // pred_check
          %p217 = pneg %p50
        $region34: #{tpu_custom_call.1} parent=31 // pred_check_branch
          %219 = sbr.rel (%p217) target = $region36
        $region35: #{tpu_custom_call.1} parent=31 // pred_region
          %s220 = sand.u32 %s40, 1
          %s221 = scalar_lea.sflag [#allocation6], %s220
          %s222 = sand.u32 %s40, 1
          %s223 = scalar_lea.vmem [#allocation5], %s222
          %s224 = sld [smem:[#allocation3 + %s28]]
          %s226 = ssub.s32 16, 16
          %227 = vsyncadd %s221, %s226
          %s228 = smul.addr %s224, 16
          %s229 = scalar_lea.hbm %s2, %s228
          %s231 = sshll.u32 %s223, 4
          %s232 = int_to_ptr.vmem [resolvable:$true] %s231
          %234 = dma.hbm_to_vmem [thread:$0]  %s229, 16, %s232, %s221
        $region36: #{tpu_custom_call.1} parent=31 // pred_fallthru
          _
      $region32: #{tpu_custom_call.1} parent=5 // pred_fallthru
        _
      %p235 = scmp.le.s32.totalorder 1, %s28
      %p236 = scmp.lt.s32.totalorder %s28, 3
      %p237 = pnand %p235, %p236
      %p238 = pneg %p237
      // Predicated region
      $region37: #{tpu_custom_call.1} parent=5 // pred_check
        _
      $region38: #{tpu_custom_call.1} parent=5 // pred_check_branch
        %240 = sbr.rel (%p237) target = $region40
      $region39: #{tpu_custom_call.1} parent=5 // pred_region
        %s241 = ssub.s32 %s28, 1
        %s242 = sand.u32 %s43, 1
        %s243 = scalar_lea.sflag [#allocation6], %s242
        %s244 = sand.u32 %s43, 1
        %s245 = scalar_lea.vmem [#allocation5], %s244
        // Predicated region
        $region41: #{tpu_custom_call.1} parent=39 // pred_check
          %p246 = pneg %p56
        $region42: #{tpu_custom_call.1} parent=39 // pred_check_branch
          %248 = sbr.rel (%p246) target = $region44
        $region43: #{tpu_custom_call.1} parent=39 // pred_region
          %249 = dma.done %s243, 16
        $region44: #{tpu_custom_call.1} parent=39 // pred_fallthru
          _
        // Predicated region
        $region45: #{tpu_custom_call.1} parent=39 // pred_check
          %p250 = pneg %p77
        $region46: #{tpu_custom_call.1} parent=39 // pred_check_branch
          %252 = sbr.rel (%p250) target = $region48
        $region47: #{tpu_custom_call.1} parent=39 // pred_region
          %253 = dma.done [#allocation9], 512
        $region48: #{tpu_custom_call.1} parent=39 // pred_fallthru
          _
        // Predicated region
        $region49: #{tpu_custom_call.1} parent=39 // pred_check
          %p254 = pneg %p119
        $region50: #{tpu_custom_call.1} parent=39 // pred_check_branch
          %256 = sbr.rel (%p254) target = $region52
        $region51: #{tpu_custom_call.1} parent=39 // pred_region
          %257 = dma.done [#allocation9], 512
        $region52: #{tpu_custom_call.1} parent=39 // pred_fallthru
          _
        %s258 = sand.u32 %s43, 1
        %s259 = scalar_lea.sflag [#allocation6], %s258
        %s260 = sand.u32 %s43, 1
        %s261 = scalar_lea.vmem [#allocation5], %s260
        %p262 = pneg %p56
        %p263 = pneg %p53
        %p264 = pneg %p77
        %p265 = pneg %p74
        %p266 = pneg %p98
        %p267 = pneg %p95
        %p268 = pneg %p119
        %p269 = pneg %p116
        %p270 = pneg %p140
        %p271 = pneg %p137
        %p272 = pneg %p166
        %p273 = pneg %p163
        %s274 = sand.u32 %s153, 1
        %s275 = scalar_lea.sflag [#allocation7], %s274
        %s276 = sand.u32 %s153, 1
        %s277 = scalar_lea.vmem [#allocation11], %s276
        %s278 = sld [smem:[#allocation3 + %s33]]
        %v279 = vld [vmem:[%s245] sm:$0x1]
        %v280 = vld [vmem:[#allocation8] sm:$0xff]
        %v281 = vld [vmem:[#allocation8 + $0x8] sm:$0xff]
        %v282 = vld [vmem:[#allocation8 + $0x10] sm:$0xff]
        %v283 = vld [vmem:[#allocation8 + $0x18] sm:$0xff]
        %v284 = vld [vmem:[%s4] sm:$0x1]
        %vm285 = vcmask 261120
        %v287 = vsel %vm285, %v279, 0
        %289 = vmatprep.subr.mxu0 0.0
        %290 = vmatpush1.msra.mxu0 %v280
        %291 = vmatprep.subr.mxu0 0.0
        %292 = vmatpush1.msra.mxu0 %v281
        %293 = vmatprep.subr.mxu0 0.0
        %294 = vmatpush1.msra.mxu0 %v282
        %295 = vmatprep.subr.mxu0 0.0
        %296 = vmatpush1.msra.mxu0 %v283
        %297 = vmatprep.subr.mxu0 0.0
        %298 = vmatpush1.msra.mxu0 0.0
        %299 = vmatprep.subr.mxu0 0.0
        %300 = vmatpush1.msra.mxu0 0.0
        %301 = vmatprep.subr.mxu0 0.0
        %302 = vmatpush1.msra.mxu0 0.0
        %303 = vmatprep.subr.mxu0 0.0
        %304 = vmatpush1.msra.mxu0 0.0
        %305 = vmatprep.subr.mxu0 0.0
        %306 = vmatpush1.msra.mxu0 0.0
        %307 = vmatprep.subr.mxu0 0.0
        %308 = vmatpush1.msra.mxu0 0.0
        %309 = vmatprep.subr.mxu0 0.0
        %310 = vmatpush1.msra.mxu0 0.0
        %311 = vmatprep.subr.mxu0 0.0
        %312 = vmatpush1.msra.mxu0 0.0
        %313 = vmatprep.subr.mxu0 0.0
        %314 = vmatpush1.msra.mxu0 0.0
        %315 = vmatprep.subr.mxu0 0.0
        %316 = vmatpush1.msra.mxu0 0.0
        %317 = vmatprep.subr.mxu0 0.0
        %318 = vmatpush1.msra.mxu0 0.0
        %319 = vmatprep.subr.mxu0 0.0
        %320 = vmatpush1.msra.mxu0 0.0
        %321 = vmatprep.subr.mxu0 0.0
        %322 = vmatpush1.msra.mxu0 0.0
        %323 = vmatprep.subr.mxu0 0.0
        %324 = vmatpush1.msra.mxu0 0.0
        %325 = vmatprep.subr.mxu0 0.0
        %326 = vmatpush1.msra.mxu0 0.0
        %327 = vmatprep.subr.mxu0 0.0
        %328 = vmatpush1.msra.mxu0 0.0
        %329 = vmatprep.subr.mxu0 0.0
        %330 = vmatpush1.msra.mxu0 0.0
        %331 = vmatprep.subr.mxu0 0.0
        %332 = vmatpush1.msra.mxu0 0.0
        %333 = vmatprep.subr.mxu0 0.0
        %334 = vmatpush1.msra.mxu0 0.0
        %335 = vmatprep.subr.mxu0 0.0
        %336 = vmatpush1.msra.mxu0 0.0
        %337 = vmatprep.subr.mxu0 0.0
        %338 = vmatpush1.msra.mxu0 0.0
        %339 = vmatprep.subr.mxu0 0.0
        %340 = vmatpush1.msra.mxu0 0.0
        %341 = vmatprep.subr.mxu0 0.0
        %342 = vmatpush1.msra.mxu0 0.0
        %343 = vmatprep.subr.mxu0 0.0
        %344 = vmatpush1.msra.mxu0 0.0
        %345 = vmatprep.subr.mxu0 0.0
        %346 = vmatpush1.msra.mxu0 0.0
        %347 = vmatprep.subr.mxu0 0.0
        %348 = vmatpush1.msra.mxu0 0.0
        %349 = vmatprep.subr.mxu0 0.0
        %350 = vmatpush1.msra.mxu0 0.0
        %351 = vmatprep.subr.mxu0 0.0
        %352 = vmatpush1.msra.mxu0 0.0
        %353 = vmatprep.mubr.f32.mxu0 0.0
        %354 = vmatmul.mubr.f32.gmra.mrb[0].mxu0 %v287
        %v355 = vpop.f32.mrb[0].mxu0
        %v356 = vadd.f32 %v284, %v355
        %v357 = vpop.f32.mrb[0].mxu0
        %358 = vdwg.mxu0
        %v359 = vmax.f32 %v356, 0.0
        %v360 = vld [vmem:[#allocation10] sm:$0xff]
        %v361 = vld [vmem:[#allocation10 + $0x8] sm:$0xff]
        %v362 = vld [vmem:[#allocation10 + $0x10] sm:$0xff]
        %v363 = vld [vmem:[#allocation10 + $0x18] sm:$0xff]
        %v364 = vld [vmem:[%s6] sm:$0x1]
        %v366 = vsel %vm285, %v359, 0
        %368 = vmatprep.subr.mxu0 0.0
        %369 = vmatpush1.msra.mxu0 %v360
        %370 = vmatprep.subr.mxu0 0.0
        %371 = vmatpush1.msra.mxu0 %v361
        %372 = vmatprep.subr.mxu0 0.0
        %373 = vmatpush1.msra.mxu0 %v362
        %374 = vmatprep.subr.mxu0 0.0
        %375 = vmatpush1.msra.mxu0 %v363
        %376 = vmatprep.subr.mxu0 0.0
        %377 = vmatpush1.msra.mxu0 0.0
        %378 = vmatprep.subr.mxu0 0.0
        %379 = vmatpush1.msra.mxu0 0.0
        %380 = vmatprep.subr.mxu0 0.0
        %381 = vmatpush1.msra.mxu0 0.0
        %382 = vmatprep.subr.mxu0 0.0
        %383 = vmatpush1.msra.mxu0 0.0
        %384 = vmatprep.subr.mxu0 0.0
        %385 = vmatpush1.msra.mxu0 0.0
        %386 = vmatprep.subr.mxu0 0.0
        %387 = vmatpush1.msra.mxu0 0.0
        %388 = vmatprep.subr.mxu0 0.0
        %389 = vmatpush1.msra.mxu0 0.0
        %390 = vmatprep.subr.mxu0 0.0
        %391 = vmatpush1.msra.mxu0 0.0
        %392 = vmatprep.subr.mxu0 0.0
        %393 = vmatpush1.msra.mxu0 0.0
        %394 = vmatprep.subr.mxu0 0.0
        %395 = vmatpush1.msra.mxu0 0.0
        %396 = vmatprep.subr.mxu0 0.0
        %397 = vmatpush1.msra.mxu0 0.0
        %398 = vmatprep.subr.mxu0 0.0
        %399 = vmatpush1.msra.mxu0 0.0
        %400 = vmatprep.subr.mxu0 0.0
        %401 = vmatpush1.msra.mxu0 0.0
        %402 = vmatprep.subr.mxu0 0.0
        %403 = vmatpush1.msra.mxu0 0.0
        %404 = vmatprep.subr.mxu0 0.0
        %405 = vmatpush1.msra.mxu0 0.0
        %406 = vmatprep.subr.mxu0 0.0
        %407 = vmatpush1.msra.mxu0 0.0
        %408 = vmatprep.subr.mxu0 0.0
        %409 = vmatpush1.msra.mxu0 0.0
        %410 = vmatprep.subr.mxu0 0.0
        %411 = vmatpush1.msra.mxu0 0.0
        %412 = vmatprep.subr.mxu0 0.0
        %413 = vmatpush1.msra.mxu0 0.0
        %414 = vmatprep.subr.mxu0 0.0
        %415 = vmatpush1.msra.mxu0 0.0
        %416 = vmatprep.subr.mxu0 0.0
        %417 = vmatpush1.msra.mxu0 0.0
        %418 = vmatprep.subr.mxu0 0.0
        %419 = vmatpush1.msra.mxu0 0.0
        %420 = vmatprep.subr.mxu0 0.0
        %421 = vmatpush1.msra.mxu0 0.0
        %422 = vmatprep.subr.mxu0 0.0
        %423 = vmatpush1.msra.mxu0 0.0
        %424 = vmatprep.subr.mxu0 0.0
        %425 = vmatpush1.msra.mxu0 0.0
        %426 = vmatprep.subr.mxu0 0.0
        %427 = vmatpush1.msra.mxu0 0.0
        %428 = vmatprep.subr.mxu0 0.0
        %429 = vmatpush1.msra.mxu0 0.0
        %430 = vmatprep.subr.mxu0 0.0
        %431 = vmatpush1.msra.mxu0 0.0
        %432 = vmatprep.mubr.f32.mxu0 0.0
        %433 = vmatmul.mubr.f32.gmra.mrb[0].mxu0 %v366
        %v434 = vpop.f32.mrb[0].mxu0
        %v435 = vadd.f32 %v364, %v434
        %v436 = vpop.f32.mrb[0].mxu0
        %437 = vdwg.mxu0
        %v438 = vlaneseq
        %v439 = vand.u32 %v438, 127
        %vm440 = vcmp.lt.s32.totalorder %v439, 3
        %v441 = vsel %vm440, %v435, -1e+30
        %vm442 = vcmask 1040384
        %v443 = vsel %vm442, %v441, -inf
        %444 = vmax.xlane.f32.xlu0 %v443
        %v445 = vpop.xlane.xlu0 %444
        %v446 = vsub.f32 %v441, %v445
        %v447 = vmul.f32 %v446, 1.442695
        %v448 = vpow.pop %v447
        %v449 = vsel %vm442, %v448, 0.0
        %450 = vadd.xlane.f32.xlu0 %v449
        %v451 = vpop.xlane.xlu0 %450
        %v452 = vlog2.pop %v451
        %v453 = vmul.f32 %v452, 0.6931472
        %v454 = vadd.f32 %v445, %v453
        %s455 = sld [smem:[#allocation4 + %s33]]
        %v456 = vstv %s455
        %vm457 = vcmp.eq.s32.totalorder %v439, %v456
        %v458 = vsel %vm457, %v435, 0.0
        %v459 = vsel %vm442, %v458, 0.0
        %460 = vadd.xlane.f32.xlu0 %v459
        %v461 = vpop.xlane.xlu0 %460
        %v462 = vsub.f32 %v454, %v461
        %v463 = vsel %vm440, %v435, 0.0
        %vm464 = vcmp.eq.s32.totalorder %v439, 3
        %v465 = vsel %vm464, %v462, %v463
        %466 = vst [vmem:[%s277] sm:$0x1] %v465
        %s467 = sand.u32 %s153, 1
        %s468 = scalar_lea.sflag [#allocation7], %s467
        %s469 = sand.u32 %s153, 1
        %s470 = scalar_lea.vmem [#allocation11], %s469
        // Predicated region
        $region53: #{tpu_custom_call.1} parent=39 // pred_check
          %p471 = pneg %p163
        $region54: #{tpu_custom_call.1} parent=39 // pred_check_branch
          %473 = sbr.rel (%p471) target = $region56
        $region55: #{tpu_custom_call.1} parent=39 // pred_region
          %s475 = ssub.s32 16, 16
          %476 = vsyncadd %s468, %s475
          %s477 = smul.addr %s33, 16
          %s478 = scalar_lea.hbm %s7, %s477
          %s480 = sshll.u32 %s470, 4
          %s481 = int_to_ptr.vmem [resolvable:$true] %s480
          %483 = dma.vmem_to_hbm [thread:$0]  %s481, 16, %s478, %s468
        $region56: #{tpu_custom_call.1} parent=39 // pred_fallthru
          _
      $region40: #{tpu_custom_call.1} parent=5 // pred_fallthru
        _
      %p484 = scmp.le.s32.totalorder 2, %s28
      // Predicated region
      $region57: #{tpu_custom_call.1} parent=5 // pred_check
        %p485 = pneg %p484
      $region58: #{tpu_custom_call.1} parent=5 // pred_check_branch
        %487 = sbr.rel (%p485) target = $region60
      $region59: #{tpu_custom_call.1} parent=5 // pred_region
        %s488 = ssub.s32 %s28, 2
        // Predicated region
        $region61: #{tpu_custom_call.1} parent=59 // pred_check
          %p489 = pneg %p169
        $region62: #{tpu_custom_call.1} parent=59 // pred_check_branch
          %491 = sbr.rel (%p489) target = $region64
        $region63: #{tpu_custom_call.1} parent=59 // pred_region
          %s492 = sand.u32 %s154, 1
          %s493 = scalar_lea.sflag [#allocation7], %s492
          %s494 = sand.u32 %s154, 1
          %s495 = scalar_lea.vmem [#allocation11], %s494
          %496 = dma.done %s493, 16
        $region64: #{tpu_custom_call.1} parent=59 // pred_fallthru
          _
      $region60: #{tpu_custom_call.1} parent=5 // pred_fallthru
        _
    $region6: #{tpu_custom_call.1} parent=1 // loop_footer
      %s32 = sadd.s32 1, %s28
    $region7: #{tpu_custom_call.1} parent=1 // loop_footer_branch
      %27 = sbr.rel target = $region3
    $region8: #{tpu_custom_call.1} parent=1 // loop_exit
      _
    %497 = vsyncpa [#allocation6], 1
    %s498 = scalar_lea.sflag [#allocation6], 1
    %499 = vsyncpa %s498, 1
    %500 = vsyncpa [#allocation9], 1
    %501 = vsyncpa [#allocation7], 1
    %s502 = scalar_lea.sflag [#allocation7], 1
    %503 = vsyncpa %s502, 1

</llo_original>
